<compile_context>
chip_gen: v5e
topology: v5e:2x2
jax: 0.10.0
libtpu: 0.0.40
codegen_flags: <defaults>
</compile_context>

<pallas_src>
import functools

import jax
import jax.numpy as jnp
from jax.experimental import pallas as pl
from jax.experimental.pallas import tpu as pltpu


def _round_up(a, b):
    return ((a + b - 1) // b) * b


def _resident_spec(shape):
    """Constant-index (weight-like) operand: VMEM-resident, single-buffered."""
    index_map = lambda *_: (0,) * len(shape)
    try:
        return pl.BlockSpec(shape, index_map, pipeline_mode=pl.Buffered(1))
    except TypeError:   # fall back to default double-buffering on older jax
        return pl.BlockSpec(shape, index_map)


# --------------------------------------------------------------------------
# Kernel 1: per-token expansion, group attention, grouped softmax activation.
# --------------------------------------------------------------------------
def _token_kernel(x_ref, we_ref, be_ref, wa_ref, ba_ref, wc_ref, ind_ref,
                  indt_ref, exp_ref, act_ref):
    # x: (tm, F) bf16; weights bf16; biases / indicators f32; outputs bf16.
    expd = jnp.dot(x_ref[...], we_ref[...],
                   preferred_element_type=jnp.float32) + be_ref[...]       # (tm, EF)
    exp_ref[...] = expd.astype(exp_ref.dtype)
    expd_b = expd.astype(jnp.bfloat16)                                     # MXU operand

    att_logit = jnp.dot(expd_b, wa_ref[...],
                        preferred_element_type=jnp.float32) + ba_ref[...]  # (tm, G)
    att = pl.reciprocal(1.0 + jnp.exp(-att_logit), approx=True)            # sigmoid

    logits = jnp.dot(expd_b, wc_ref[...],
                     preferred_element_type=jnp.float32)                   # (tm, G*C)
    # Per-group softmax via a single row-global max shift (exactly equivalent
    # per group) and indicator matmuls: denominators gathered on the MXU,
    # attention folded into the per-group scale, scale broadcast back on MXU.
    e = jnp.exp(logits - jnp.max(logits, axis=-1, keepdims=True))          # (tm, G*C)
    denom = jnp.dot(e, ind_ref[...], preferred_element_type=jnp.float32)   # (tm, G)
    scale = att * pl.reciprocal(jnp.maximum(denom, 1e-30), approx=True)    # (tm, G)
    scale_full = jnp.dot(scale, indt_ref[...],
                         preferred_element_type=jnp.float32)               # (tm, G*C)
    act_ref[...] = (e * scale_full).astype(act_ref.dtype)


# --------------------------------------------------------------------------
# Kernel 2: per-sample VLAD aggregation + intra-normalization (Bt per step).
# --------------------------------------------------------------------------
def _aggregate_kernel(feats_ref, acts_ref, cw_ref, vlad_ref, *, block_batch):
    cw = cw_ref[...]                                                 # (NF, C) f32
    for i in range(block_batch):                                     # small, unrolled
        feats = feats_ref[i]                                         # (M*G, NF) bf16
        acts = acts_ref[i]                                           # (M*G, C)  bf16
        a_sum = jnp.sum(acts.astype(jnp.float32), axis=0, keepdims=True)   # (1, C)
        vlad = jax.lax.dot_general(                                  # feats^T @ acts
            feats, acts, dimension_numbers=(((0,), (0,)), ((), ())),
            preferred_element_type=jnp.float32)                      # (NF, C)
        v = vlad - a_sum * cw
        ssq = jnp.sum(v * v, axis=0, keepdims=True)                  # L2 over NF axis
        v = v * jax.lax.rsqrt(jnp.maximum(ssq, 1e-24))               # == /max(norm,1e-12)
        vlad_ref[i] = v.astype(vlad_ref.dtype)


# --------------------------------------------------------------------------
# Kernel 3: final fully-connected projection, K-tiled with f32 accumulator.
# --------------------------------------------------------------------------
def _fc_kernel(v_ref, w_ref, b_ref, o_ref, acc_ref):
    @pl.when(pl.program_id(0) == 0)
    def _():
        acc_ref[...] = jnp.zeros_like(acc_ref)

    acc_ref[...] += jnp.dot(v_ref[...], w_ref[...],
                            preferred_element_type=jnp.float32)

    @pl.when(pl.program_id(0) == pl.num_programs(0) - 1)
    def _():
        o_ref[...] = (acc_ref[...] + b_ref[...]).astype(o_ref.dtype)


# --------------------------------------------------------------------------
# Wrapper
# --------------------------------------------------------------------------
def nextvlad_forward(x, mask=None, *, params, cluster_size, expansion=2,
                     groups=8, tm=512, batch_block=8, fc_k_tile=2048):
    """x: (batch, frames, feature_size). Returns (batch, output_size)."""
    # mask is accepted but unused: the reference forward never applies it.
    # TODO(synk): zero masked-token activations before the VLAD sum if padded
    #             frames ever appear in production inputs.
    del mask
    B, M, F = x.shape
    EF = expansion * F
    G = groups
    C = cluster_size
    NF = EF // G
    O = params["wfc"].shape[1]

    # ---- operand prep: bf16 MXU operands, f32 biases / cluster weight ------
    we = params["we"].astype(jnp.bfloat16)
    wa = params["wa"].astype(jnp.bfloat16)
    wc = params["wc"].astype(jnp.bfloat16)
    be = params["be"].reshape(1, EF).astype(jnp.float32)
    ba = params["ba"].reshape(1, G).astype(jnp.float32)
    cw2d = params["cw"].reshape(NF, C).astype(jnp.float32)

    # Group-indicator matrices for the per-group softmax matmuls.
    gidx = jnp.arange(G * C, dtype=jnp.int32) // C
    ind = (gidx[:, None] == jnp.arange(G, dtype=jnp.int32)[None, :]).astype(jnp.float32)
    indt = ind.T

    # ---- kernel 1: token-parallel expansion / attention / activation -------
    N = B * M
    tm = min(tm, _round_up(N, 8))                  # big row tile, clamped to N
    n_pad = _round_up(N, tm)
    x2d = x.reshape(N, F).astype(jnp.bfloat16)
    if n_pad != N:
        x2d = jnp.pad(x2d, ((0, n_pad - N), (0, 0)))

    tile_bytes = tm * (F + 2 * EF + 2 * G * C) * 2               # x + bf16 outputs
    weight_bytes = ((F * EF + EF * G + EF * G * C) * 2           # bf16 weights
                    + (EF + G) * 4 + 2 * G * G * C * 4)          # biases + indicators
    vmem_token = int(min(64 * 2 ** 20,
                         max(32 * 2 ** 20, 2 * (2 * tile_bytes + weight_bytes))))

    cost = pl.CostEstimate(
        flops=int(2 * N * (F * EF + EF * G + EF * G * C + 2 * G * G * C)),
        transcendentals=int(N * (G * C + 3 * G)),
        bytes_accessed=int(2 * N * (F + EF + G * C) + weight_bytes))

    exp2d, act2d = pl.pallas_call(
        _token_kernel,
        out_shape=(jax.ShapeDtypeStruct((n_pad, EF), jnp.bfloat16),
                   jax.ShapeDtypeStruct((n_pad, G * C), jnp.bfloat16)),
        grid_spec=pltpu.PrefetchScalarGridSpec(
            num_scalar_prefetch=0,
            grid=(n_pad // tm,),
            in_specs=[
                pl.BlockSpec((tm, F), lambda i: (i, 0)),         # token tile
                _resident_spec((F, EF)),                         # W_expansion
                _resident_spec((1, EF)),                         # b_expansion
                _resident_spec((EF, G)),                         # W_attention
                _resident_spec((1, G)),                          # b_attention
                _resident_spec((EF, G * C)),                     # W_cluster
                _resident_spec((G * C, G)),                      # group indicator
                _resident_spec((G, G * C)),                      # indicator^T
            ],
            out_specs=[
                pl.BlockSpec((tm, EF), lambda i: (i, 0)),
                pl.BlockSpec((tm, G * C), lambda i: (i, 0)),
            ]),
        compiler_params=pltpu.CompilerParams(
            dimension_semantics=("parallel",),
            vmem_limit_bytes=vmem_token),
        cost_estimate=cost,
    )(x2d, we, be, wa, ba, wc, ind, indt)

    # Cheap contiguous wrapper reshapes (bf16 halves the HBM round trip).
    feats = exp2d[:N].reshape(B, M * G, NF)
    acts = act2d[:N].reshape(B, M * G, C)

    # ---- kernel 2: VLAD aggregation, Bt samples per grid step --------------
    Bt = max(1, min(batch_block, B))
    b_pad = _round_up(B, Bt)
    if b_pad != B:
        feats = jnp.pad(feats, ((0, b_pad - B), (0, 0), (0, 0)))
        acts = jnp.pad(acts, ((0, b_pad - B), (0, 0), (0, 0)))

    vlad = pl.pallas_call(
        functools.partial(_aggregate_kernel, block_batch=Bt),
        out_shape=jax.ShapeDtypeStruct((b_pad, NF, C), jnp.bfloat16),
        grid_spec=pltpu.PrefetchScalarGridSpec(
            num_scalar_prefetch=0,
            grid=(b_pad // Bt,),
            in_specs=[
                pl.BlockSpec((Bt, M * G, NF), lambda b: (b, 0, 0)),
                pl.BlockSpec((Bt, M * G, C), lambda b: (b, 0, 0)),
                _resident_spec((NF, C)),
            ],
            out_specs=pl.BlockSpec((Bt, NF, C), lambda b: (b, 0, 0))),
        compiler_params=pltpu.CompilerParams(
            dimension_semantics=("parallel",)),
    )(feats, acts, cw2d)

    # ---- kernel 3: final projection, K-tiled over NF*C ---------------------
    vlad2d = vlad[:B].reshape(B, NF * C)                 # nf-major, c-minor flatten
    KD = NF * C
    tk = _round_up(min(fc_k_tile, _round_up(KD, 128)), 128)
    kd_pad = _round_up(KD, tk)
    wfc = params["wfc"].astype(jnp.bfloat16)
    if kd_pad != KD:
        vlad2d = jnp.pad(vlad2d, ((0, 0), (0, kd_pad - KD)))
        wfc = jnp.pad(wfc, ((0, kd_pad - KD), (0, 0)))
    bfc = params["bfc"].reshape(1, O).astype(jnp.float32)

    vmem_fc = int(min(64 * 2 ** 20,
                      max(32 * 2 ** 20,
                          2 * (2 * (B * tk + tk * O) * 2 + O * 4 + B * O * 8))))

    out = pl.pallas_call(
        _fc_kernel,
        out_shape=jax.ShapeDtypeStruct((B, O), x.dtype),
        grid_spec=pltpu.PrefetchScalarGridSpec(
            num_scalar_prefetch=0,
            grid=(kd_pad // tk,),
            in_specs=[
                pl.BlockSpec((B, tk), lambda k: (0, k)),
                pl.BlockSpec((tk, O), lambda k: (k, 0)),
                _resident_spec((1, O)),
            ],
            out_specs=pl.BlockSpec((B, O), lambda k: (0, 0)),
            scratch_shapes=[pltpu.VMEM((B, O), jnp.float32)]),
        compiler_params=pltpu.CompilerParams(
            dimension_semantics=("arbitrary",),
            vmem_limit_bytes=vmem_fc),
    )(vlad2d, wfc, bfc)

    return out


# --------------------------------------------------------------------------
# Params (mimics PyTorch nn.Linear / normal_(std=0.01) init conventions)
# --------------------------------------------------------------------------
def init_params(key, feature_size, cluster_size, output_size=1024,
                expansion=2, groups=8, dtype=jnp.float32):
    F = feature_size
    EF = expansion * F
    G = groups
    C = cluster_size
    NF = EF // G
    ks = jax.random.split(key, 9)

    def linear(kw, kb, fan_in, fan_out, bias=True):
        lim = 1.0 / (fan_in ** 0.5)
        w = jax.random.uniform(kw, (fan_in, fan_out), dtype, -lim, lim)
        b = jax.random.uniform(kb, (fan_out,), dtype, -lim, lim) if bias else None
        return w, b

    we, be = linear(ks[0], ks[1], F, EF)
    wa, ba = linear(ks[2], ks[3], EF, G)
    wc, _ = linear(ks[4], ks[5], EF, G * C, bias=False)
    cw = 0.01 * jax.random.normal(ks[6], (1, NF, C), dtype)
    wfc, bfc = linear(ks[7], ks[8], NF * C, output_size)
    return dict(we=we, be=be, wa=wa, ba=ba, wc=wc, cw=cw, wfc=wfc, bfc=bfc)


# --------------------------------------------------------------------------
# Pure-JAX reference (mirrors the PyTorch forward exactly, eval mode)
# --------------------------------------------------------------------------
def nextvlad_reference(x, params, *, cluster_size, expansion, groups):
    B, M, F = x.shape
    EF = expansion * F
    G = groups
    C = cluster_size
    NF = EF // G
    hp = jax.lax.Precision.HIGHEST

    inp = jnp.dot(x.reshape(B * M, F), params["we"], precision=hp) + params["be"]
    att = jax.nn.sigmoid(jnp.dot(inp, params["wa"], precision=hp) + params["ba"])
    att = att.reshape(B, M * G, 1)
    act = jnp.dot(inp, params["wc"], precision=hp).reshape(B, M * G, C)
    act = jax.nn.softmax(act, axis=-1) * att
    a_sum = jnp.sum(act, axis=1, keepdims=True)            # (B, 1, C)
    a = a_sum * params["cw"]                                # (B, NF, C)
    feats = inp.reshape(B, M * G, NF)
    vlad = jnp.einsum("bkc,bkn->bnc", act, feats, precision=hp)
    vlad = vlad - a
    norm = jnp.sqrt(jnp.sum(vlad * vlad, axis=1, keepdims=True))
    vlad = vlad / jnp.maximum(norm, 1e-12)
    vlad = vlad.reshape(B, NF * C)
    return jnp.dot(vlad, params["wfc"], precision=hp) + params["bfc"]


if __name__ == "__main__":
    # Small but lane-friendly shapes: E*F = 128, G*C = 256, NF*C = 512, O = 128.
    B, M = 2, 8
    feature_size, cluster_size = 64, 32
    expansion, groups, output_size = 2, 8, 128

    key = jax.random.PRNGKey(0)
    kx, kp = jax.random.split(key)
    x = jax.random.normal(kx, (B, M, feature_size), jnp.float32)
    mask = jnp.ones((B, M), jnp.float32)   # unused by the reference forward
    params = init_params(kp, feature_size, cluster_size, output_size,
                         expansion, groups)

    out = nextvlad_forward(x, mask, params=params, cluster_size=cluster_size,
                           expansion=expansion, groups=groups)
    out = jax.block_until_ready(out)

    ref = nextvlad_reference(x, params, cluster_size=cluster_size,
                             expansion=expansion, groups=groups)

    assert out.shape == (B, output_size) and out.dtype == x.dtype
    # bf16 MXU operands + bf16 intermediate stores (f32 accumulate): 5e-3 tol.
    assert jnp.allclose(out, ref, atol=5e-3, rtol=5e-3), \
        float(jnp.max(jnp.abs(out - ref)))
    print("KERNEL_OK")
</pallas_src>

<mosaic_0001>
module attributes {stable_mosaic.version = 11 : i64} {
  func.func @_token_kernel(%arg0: i32, %arg1: memref<16x64xbf16, #tpu.memory_space<vmem>>, %arg2: memref<64x128xbf16, #tpu.memory_space<vmem>>, %arg3: memref<1x128xf32, #tpu.memory_space<vmem>>, %arg4: memref<128x8xbf16, #tpu.memory_space<vmem>>, %arg5: memref<1x8xf32, #tpu.memory_space<vmem>>, %arg6: memref<128x256xbf16, #tpu.memory_space<vmem>>, %arg7: memref<256x8xf32, #tpu.memory_space<vmem>>, %arg8: memref<8x256xf32, #tpu.memory_space<vmem>>, %arg9: memref<16x128xbf16, #tpu.memory_space<vmem>>, %arg10: memref<16x256xbf16, #tpu.memory_space<vmem>>) attributes {dimension_semantics = [#tpu.dimension_semantics<parallel>], iteration_bounds = array<i64: 1>, scalar_prefetch = 0 : i64, scratch_operands = 0 : i64, tpu.core_type = #tpu.core_type<tc>, window_params = [{transform_indices = @transform_0, window_bounds = array<i64: 16, 64>}, {pipeline_mode = #tpu.pipeline_mode<synchronous>, transform_indices = @transform_1, window_bounds = array<i64: 64, 128>}, {pipeline_mode = #tpu.pipeline_mode<synchronous>, transform_indices = @transform_2, window_bounds = array<i64: 1, 128>}, {pipeline_mode = #tpu.pipeline_mode<synchronous>, transform_indices = @transform_3, window_bounds = array<i64: 128, 8>}, {pipeline_mode = #tpu.pipeline_mode<synchronous>, transform_indices = @transform_4, window_bounds = array<i64: 1, 8>}, {pipeline_mode = #tpu.pipeline_mode<synchronous>, transform_indices = @transform_5, window_bounds = array<i64: 128, 256>}, {pipeline_mode = #tpu.pipeline_mode<synchronous>, transform_indices = @transform_6, window_bounds = array<i64: 256, 8>}, {pipeline_mode = #tpu.pipeline_mode<synchronous>, transform_indices = @transform_7, window_bounds = array<i64: 8, 256>}, {transform_indices = @transform_8, window_bounds = array<i64: 16, 128>}, {transform_indices = @transform_9, window_bounds = array<i64: 16, 256>}]} {
    %c0 = arith.constant 0 : index
    %c0_0 = arith.constant 0 : index
    %0 = vector.load %arg1[%c0, %c0_0] : memref<16x64xbf16, #tpu.memory_space<vmem>>, vector<16x64xbf16>
    %c0_1 = arith.constant 0 : index
    %c0_2 = arith.constant 0 : index
    %1 = vector.load %arg2[%c0_1, %c0_2] : memref<64x128xbf16, #tpu.memory_space<vmem>>, vector<64x128xbf16>
    %cst = arith.constant dense<0.000000e+00> : vector<16x128xf32>
    %2 = tpu.matmul %0, %1, %cst {dimension_numbers = #tpu.dot_dimension_numbers<[1], [0], [0], [1], [0, 0, 1, 1], [], []>} : vector<16x64xbf16>, vector<64x128xbf16>, vector<16x128xf32> -> vector<16x128xf32>
    %c0_3 = arith.constant 0 : index
    %c0_4 = arith.constant 0 : index
    %3 = vector.load %arg3[%c0_3, %c0_4] : memref<1x128xf32, #tpu.memory_space<vmem>>, vector<1x128xf32>
    %4 = vector.broadcast %3 : vector<1x128xf32> to vector<16x128xf32>
    %5 = arith.addf %2, %4 : vector<16x128xf32>
    %6 = arith.truncf %5 : vector<16x128xf32> to vector<16x128xbf16>
    %c0_5 = arith.constant 0 : index
    %c0_6 = arith.constant 0 : index
    %7 = vector.load %arg9[%c0_5, %c0_6] : memref<16x128xbf16, #tpu.memory_space<vmem>>, vector<16x128xbf16>
    tpu.vector_store %arg9[%c0_5, %c0_6], %6 {strides = array<i32>} : memref<16x128xbf16, #tpu.memory_space<vmem>>, vector<16x128xbf16>,
    %8 = arith.truncf %5 : vector<16x128xf32> to vector<16x128xbf16>
    %c0_7 = arith.constant 0 : index
    %c0_8 = arith.constant 0 : index
    %9 = vector.load %arg4[%c0_7, %c0_8] : memref<128x8xbf16, #tpu.memory_space<vmem>>, vector<128x8xbf16>
    %cst_9 = arith.constant dense<0.000000e+00> : vector<16x8xf32>
    %10 = tpu.matmul %8, %9, %cst_9 {dimension_numbers = #tpu.dot_dimension_numbers<[1], [0], [0], [1], [0, 0, 1, 1], [], []>} : vector<16x128xbf16>, vector<128x8xbf16>, vector<16x8xf32> -> vector<16x8xf32>
    %c0_10 = arith.constant 0 : index
    %c0_11 = arith.constant 0 : index
    %11 = vector.load %arg5[%c0_10, %c0_11] : memref<1x8xf32, #tpu.memory_space<vmem>>, vector<1x8xf32>
    %12 = vector.broadcast %11 : vector<1x8xf32> to vector<16x8xf32>
    %13 = arith.addf %10, %12 : vector<16x8xf32>
    %cst_12 = arith.constant 0.000000e+00 : f32
    %14 = vector.broadcast %cst_12 : f32 to vector<16x8xf32>
    %15 = arith.subf %14, %13 : vector<16x8xf32>
    %16 = math.exp %15 : vector<16x8xf32>
    %cst_13 = arith.constant 1.000000e+00 : f32
    %17 = vector.broadcast %cst_13 : f32 to vector<16x8xf32>
    %18 = arith.addf %17, %16 : vector<16x8xf32>
    %19 = tpu.reciprocal %18 {approx = true} : vector<16x8xf32> -> vector<16x8xf32>
    %c0_14 = arith.constant 0 : index
    %c0_15 = arith.constant 0 : index
    %20 = vector.load %arg6[%c0_14, %c0_15] : memref<128x256xbf16, #tpu.memory_space<vmem>>, vector<128x256xbf16>
    %cst_16 = arith.constant dense<0.000000e+00> : vector<16x256xf32>
    %21 = tpu.matmul %8, %20, %cst_16 {dimension_numbers = #tpu.dot_dimension_numbers<[1], [0], [0], [1], [0, 0, 1, 1], [], []>} : vector<16x128xbf16>, vector<128x256xbf16>, vector<16x256xf32> -> vector<16x256xf32>
    %cst_17 = arith.constant dense<0xFF800000> : vector<16xf32>
    %22 = vector.multi_reduction <maximumf>, %21, %cst_17 [1] : vector<16x256xf32> to vector<16xf32>
    %23 = vector.shape_cast %22 : vector<16xf32> to vector<16x1xf32>
    %24 = vector.broadcast %23 : vector<16x1xf32> to vector<16x256xf32>
    %25 = arith.subf %21, %24 : vector<16x256xf32>
    %26 = math.exp %25 : vector<16x256xf32>
    %c0_18 = arith.constant 0 : index
    %c0_19 = arith.constant 0 : index
    %27 = vector.load %arg7[%c0_18, %c0_19] : memref<256x8xf32, #tpu.memory_space<vmem>>, vector<256x8xf32>
    %cst_20 = arith.constant dense<0.000000e+00> : vector<16x8xf32>
    %28 = tpu.matmul %26, %27, %cst_20 {dimension_numbers = #tpu.dot_dimension_numbers<[1], [0], [0], [1], [0, 0, 1, 1], [], []>} : vector<16x256xf32>, vector<256x8xf32>, vector<16x8xf32> -> vector<16x8xf32>
    %cst_21 = arith.constant 1.000000e-30 : f32
    %29 = vector.broadcast %cst_21 : f32 to vector<16x8xf32>
    %30 = arith.maximumf %28, %29 : vector<16x8xf32>
    %31 = tpu.reciprocal %30 {approx = true} : vector<16x8xf32> -> vector<16x8xf32>
    %32 = arith.mulf %19, %31 : vector<16x8xf32>
    %c0_22 = arith.constant 0 : index
    %c0_23 = arith.constant 0 : index
    %33 = vector.load %arg8[%c0_22, %c0_23] : memref<8x256xf32, #tpu.memory_space<vmem>>, vector<8x256xf32>
    %cst_24 = arith.constant dense<0.000000e+00> : vector<16x256xf32>
    %34 = tpu.matmul %32, %33, %cst_24 {dimension_numbers = #tpu.dot_dimension_numbers<[1], [0], [0], [1], [0, 0, 1, 1], [], []>} : vector<16x8xf32>, vector<8x256xf32>, vector<16x256xf32> -> vector<16x256xf32>
    %35 = arith.mulf %26, %34 : vector<16x256xf32>
    %36 = arith.truncf %35 : vector<16x256xf32> to vector<16x256xbf16>
    %c0_25 = arith.constant 0 : index
    %c0_26 = arith.constant 0 : index
    %37 = vector.load %arg10[%c0_25, %c0_26] : memref<16x256xbf16, #tpu.memory_space<vmem>>, vector<16x256xbf16>
    tpu.vector_store %arg10[%c0_25, %c0_26], %36 {strides = array<i32>} : memref<16x256xbf16, #tpu.memory_space<vmem>>, vector<16x256xbf16>,
    return
  }
  func.func @transform_0(%arg0: i32) -> (i32, i32) {
    %c0_i32 = arith.constant 0 : i32
    %c0_i32_0 = arith.constant 0 : i32
    return %arg0, %c0_i32 : i32, i32
  }
  func.func @transform_1(%arg0: i32) -> (i32, i32) {
    %c0_i32 = arith.constant 0 : i32
    %c0_i32_0 = arith.constant 0 : i32
    %c0_i32_1 = arith.constant 0 : i32
    return %c0_i32, %c0_i32_0 : i32, i32
  }
  func.func @transform_2(%arg0: i32) -> (i32, i32) {
    %c0_i32 = arith.constant 0 : i32
    %c0_i32_0 = arith.constant 0 : i32
    %c0_i32_1 = arith.constant 0 : i32
    return %c0_i32, %c0_i32_0 : i32, i32
  }
  func.func @transform_3(%arg0: i32) -> (i32, i32) {
    %c0_i32 = arith.constant 0 : i32
    %c0_i32_0 = arith.constant 0 : i32
    %c0_i32_1 = arith.constant 0 : i32
    return %c0_i32, %c0_i32_0 : i32, i32
  }
  func.func @transform_4(%arg0: i32) -> (i32, i32) {
    %c0_i32 = arith.constant 0 : i32
    %c0_i32_0 = arith.constant 0 : i32
    %c0_i32_1 = arith.constant 0 : i32
    return %c0_i32, %c0_i32_0 : i32, i32
  }
  func.func @transform_5(%arg0: i32) -> (i32, i32) {
    %c0_i32 = arith.constant 0 : i32
    %c0_i32_0 = arith.constant 0 : i32
    %c0_i32_1 = arith.constant 0 : i32
    return %c0_i32, %c0_i32_0 : i32, i32
  }
  func.func @transform_6(%arg0: i32) -> (i32, i32) {
    %c0_i32 = arith.constant 0 : i32
    %c0_i32_0 = arith.constant 0 : i32
    %c0_i32_1 = arith.constant 0 : i32
    return %c0_i32, %c0_i32_0 : i32, i32
  }
  func.func @transform_7(%arg0: i32) -> (i32, i32) {
    %c0_i32 = arith.constant 0 : i32
    %c0_i32_0 = arith.constant 0 : i32
    %c0_i32_1 = arith.constant 0 : i32
    return %c0_i32, %c0_i32_0 : i32, i32
  }
  func.func @transform_8(%arg0: i32) -> (i32, i32) {
    %c0_i32 = arith.constant 0 : i32
    %c0_i32_0 = arith.constant 0 : i32
    return %arg0, %c0_i32 : i32, i32
  }
  func.func @transform_9(%arg0: i32) -> (i32, i32) {
    %c0_i32 = arith.constant 0 : i32
    %c0_i32_0 = arith.constant 0 : i32
    return %arg0, %c0_i32 : i32, i32
  }
}

</mosaic_0001>

<llo_original>
// kernel: tpu_custom_call.1
$region0: #{tpu_custom_call.1}
  #allocation0 [shape = 'u32[]', space=smem, size = 0x4, offset = 0x4, fixed_abs, tag = 'smem constant byte address 0x4 - core index']
  #allocation1 [shape = 'u32[72,128]{1,0:T(1,128)}', space=vmem, size = 0x9000, scoped, tag = 'internal scratch']
  %s0 = inlined_call_operand.vmem [shape: bf16[16,64], index: 0, kind: input, shape index: {}]
  %s1 = inlined_call_operand.vmem [shape: bf16[64,128], index: 1, kind: input, shape index: {}]
  %s2 = inlined_call_operand.vmem [shape: f32[1,128], index: 2, kind: input, shape index: {}]
  %s3 = inlined_call_operand.vmem [shape: bf16[128,8], index: 3, kind: input, shape index: {}]
  %s4 = inlined_call_operand.vmem [shape: f32[1,8], index: 4, kind: input, shape index: {}]
  %s5 = inlined_call_operand.vmem [shape: bf16[128,256], index: 5, kind: input, shape index: {}]
  %s6 = inlined_call_operand.vmem [shape: f32[256,8], index: 6, kind: input, shape index: {}]
  %s7 = inlined_call_operand.vmem [shape: f32[8,256], index: 7, kind: input, shape index: {}]
  %s8 = inlined_call_operand.hbm [shape: bf16[16,128], index: 8, kind: output, shape index: {0}]
  %s9 = inlined_call_operand.hbm [shape: bf16[16,256], index: 9, kind: output, shape index: {1}]
  %10 = xla_tuple %s8, %s9
  %s11 = sld [smem:[#allocation0]]
  $region50: #{tpu_custom_call.1} parent=0
    _
  %s13 = ssub.s32 1, %s11
  %s14 = scalar_select 0, %s13, %s11
  $region1: #{tpu_custom_call.1} parent=0
    #allocation2 [shape = 'u8[4096]{0}', space=vmem, size = 0x1000, scoped, tag = 'output window, operand 0, single buffered']
    #allocation3 [shape = 's32[1]{0}', space=sflag, size = 0x4, scoped, tag = 'scoped memory for tpu_custom_call.1']
    #allocation4 [shape = 'u8[8192]{0}', space=vmem, size = 0x2000, scoped, tag = 'output window, operand 1, single buffered']
    #allocation5 [shape = 's32[1]{0}', space=sflag, size = 0x4, scoped, tag = 'scoped memory for tpu_custom_call.1']
    %15 = vsyncpa [#allocation3], 0
    %16 = vsyncpa [#allocation5], 0
    // Predicated region
    $region2: #{tpu_custom_call.1} parent=1 // pred_check
      _
    $region3: #{tpu_custom_call.1} parent=1 // pred_check_branch
      %18 = sbr.rel (0) target = $region5
    $region4: #{tpu_custom_call.1} parent=1 // pred_region
      _
    $region5: #{tpu_custom_call.1} parent=1 // pred_fallthru
      _
    // Predicated region
    $region6: #{tpu_custom_call.1} parent=1 // pred_check
      _
    $region7: #{tpu_custom_call.1} parent=1 // pred_check_branch
      %20 = sbr.rel (0) target = $region9
    $region8: #{tpu_custom_call.1} parent=1 // pred_region
      _
    $region9: #{tpu_custom_call.1} parent=1 // pred_fallthru
      _
    // Predicated region
    $region10: #{tpu_custom_call.1} parent=1 // pred_check
      _
    $region11: #{tpu_custom_call.1} parent=1 // pred_check_branch
      %22 = sbr.rel (0) target = $region13
    $region12: #{tpu_custom_call.1} parent=1 // pred_region
      _
    $region13: #{tpu_custom_call.1} parent=1 // pred_fallthru
      _
    // Predicated region
    $region14: #{tpu_custom_call.1} parent=1 // pred_check
      _
    $region15: #{tpu_custom_call.1} parent=1 // pred_check_branch
      %24 = sbr.rel (0) target = $region17
    $region16: #{tpu_custom_call.1} parent=1 // pred_region
      _
    $region17: #{tpu_custom_call.1} parent=1 // pred_fallthru
      _
    // Predicated region
    $region18: #{tpu_custom_call.1} parent=1 // pred_check
      _
    $region19: #{tpu_custom_call.1} parent=1 // pred_check_branch
      %26 = sbr.rel (0) target = $region21
    $region20: #{tpu_custom_call.1} parent=1 // pred_region
      _
    $region21: #{tpu_custom_call.1} parent=1 // pred_fallthru
      _
    // Predicated region
    $region22: #{tpu_custom_call.1} parent=1 // pred_check
      _
    $region23: #{tpu_custom_call.1} parent=1 // pred_check_branch
      %28 = sbr.rel (0) target = $region25
    $region24: #{tpu_custom_call.1} parent=1 // pred_region
      _
    $region25: #{tpu_custom_call.1} parent=1 // pred_fallthru
      _
    // Predicated region
    $region26: #{tpu_custom_call.1} parent=1 // pred_check
      _
    $region27: #{tpu_custom_call.1} parent=1 // pred_check_branch
      %30 = sbr.rel (0) target = $region29
    $region28: #{tpu_custom_call.1} parent=1 // pred_region
      _
    $region29: #{tpu_custom_call.1} parent=1 // pred_fallthru
      _
    // Predicated region
    $region30: #{tpu_custom_call.1} parent=1 // pred_check
      _
    $region31: #{tpu_custom_call.1} parent=1 // pred_check_branch
      %32 = sbr.rel (0) target = $region33
    $region32: #{tpu_custom_call.1} parent=1 // pred_region
      _
    $region33: #{tpu_custom_call.1} parent=1 // pred_fallthru
      _
    %v34 = vld [vmem:[%s0] sm:$0xf]
    %v35 = vld [vmem:[%s0 + $0x4] sm:$0xf]
    %v36 = vld [vmem:[%s1] sm:$0xf]
    %v37 = vld [vmem:[%s1 + $0x4] sm:$0xf]
    %v38 = vld [vmem:[%s1 + $0x8] sm:$0xf]
    %v39 = vld [vmem:[%s1 + $0xc] sm:$0xf]
    %v40 = vld [vmem:[%s1 + $0x10] sm:$0xf]
    %v41 = vld [vmem:[%s1 + $0x14] sm:$0xf]
    %v42 = vld [vmem:[%s1 + $0x18] sm:$0xf]
    %v43 = vld [vmem:[%s1 + $0x1c] sm:$0xf]
    %v44 = vld [vmem:[%s2] sm:$0x1]
    %v46 = vperm.slane %v44, 0
    %v50 = vunpack.c.l.b16 %v34
    %v51 = vunpack.c.l.b16 %v35
    %v52 = vpack.c.b16 %v51, %v50
    %v61 = vunpack.c.l.b16 %v36
    %v62 = vunpack.c.l.b16 %v37
    %v63 = vunpack.c.l.b16 %v38
    %v64 = vunpack.c.l.b16 %v39
    %v65 = vunpack.c.l.b16 %v40
    %v66 = vunpack.c.l.b16 %v41
    %v67 = vunpack.c.l.b16 %v42
    %v68 = vunpack.c.l.b16 %v43
    %v69 = vpack.c.b16 %v62, %v61
    %v70 = vpack.c.b16 %v64, %v63
    %v71 = vpack.c.b16 %v66, %v65
    %v72 = vpack.c.b16 %v68, %v67
    %vm77 = vcmask 523264
    %v79 = vsel %vm77, %v52, 0
    %81 = vmatpush.bf16.msra.mxu0 0
    %82 = vmatpush.bf16.msra.mxu0 0
    %83 = vmatpush.bf16.msra.mxu0 0
    %84 = vmatpush.bf16.msra.mxu0 0
    %85 = vmatpush.bf16.msra.mxu0 %v72
    %86 = vmatpush.bf16.msra.mxu0 %v71
    %87 = vmatpush.bf16.msra.mxu0 %v70
    %88 = vmatpush.bf16.msra.mxu0 %v69
    %89 = vmatmul.bf16.gmra.mxu0 %v79
    %v90 = vpop.f32.mrf.mxu0
    %v91 = vadd.f32 %v46, %v90
    %v92 = vpop.f32.mrf.mxu0
    %v93 = vadd.f32 %v46, %v92
    %94 = vdwg.mxu0
    %v95 = vpack.c.bf16 %v91, %v91
    %v96 = vpack.c.bf16 %v93, %v93
    %97 = vst [vmem:[#allocation2] sm:$0xf] %v95
    %98 = vst [vmem:[#allocation2 + $0x4] sm:$0xf] %v96
    %v99 = vld [vmem:[%s3] sm:$0xf]
    %v100 = vld [vmem:[%s3 + $0x4] sm:$0xf]
    %v101 = vld [vmem:[%s3 + $0x8] sm:$0xf]
    %v102 = vld [vmem:[%s3 + $0xc] sm:$0xf]
    %v103 = vld [vmem:[%s3 + $0x10] sm:$0xf]
    %v104 = vld [vmem:[%s3 + $0x14] sm:$0xf]
    %v105 = vld [vmem:[%s3 + $0x18] sm:$0xf]
    %v106 = vld [vmem:[%s3 + $0x1c] sm:$0xf]
    %v107 = vld [vmem:[%s3 + $0x20] sm:$0xf]
    %v108 = vld [vmem:[%s3 + $0x24] sm:$0xf]
    %v109 = vld [vmem:[%s3 + $0x28] sm:$0xf]
    %v110 = vld [vmem:[%s3 + $0x2c] sm:$0xf]
    %v111 = vld [vmem:[%s3 + $0x30] sm:$0xf]
    %v112 = vld [vmem:[%s3 + $0x34] sm:$0xf]
    %v113 = vld [vmem:[%s3 + $0x38] sm:$0xf]
    %v114 = vld [vmem:[%s3 + $0x3c] sm:$0xf]
    %v115 = vld [vmem:[%s4] sm:$0x1]
    %v117 = vperm.slane %v115, 0
    %v121 = vunpack.c.l.b16 %v95
    %v122 = vunpack.c.l.b16 %v96
    %v123 = vpack.c.b16 %v122, %v121
    %v141 = vunpack.c.l.b16 %v99
    %v142 = vunpack.c.l.b16 %v100
    %v143 = vunpack.c.l.b16 %v101
    %v144 = vunpack.c.l.b16 %v102
    %v145 = vunpack.c.l.b16 %v103
    %v146 = vunpack.c.l.b16 %v104
    %v147 = vunpack.c.l.b16 %v105
    %v148 = vunpack.c.l.b16 %v106
    %v149 = vunpack.c.l.b16 %v107
    %v150 = vunpack.c.l.b16 %v108
    %v151 = vunpack.c.l.b16 %v109
    %v152 = vunpack.c.l.b16 %v110
    %v153 = vunpack.c.l.b16 %v111
    %v154 = vunpack.c.l.b16 %v112
    %v155 = vunpack.c.l.b16 %v113
    %v156 = vunpack.c.l.b16 %v114
    %v157 = vpack.c.b16 %v142, %v141
    %v158 = vpack.c.b16 %v144, %v143
    %v159 = vpack.c.b16 %v146, %v145
    %v160 = vpack.c.b16 %v148, %v147
    %v161 = vpack.c.b16 %v150, %v149
    %v162 = vpack.c.b16 %v152, %v151
    %v163 = vpack.c.b16 %v154, %v153
    %v164 = vpack.c.b16 %v156, %v155
    %173 = vmatpush.bf16.msra.mxu0 %v164
    %174 = vmatpush.bf16.msra.mxu0 %v163
    %175 = vmatpush.bf16.msra.mxu0 %v162
    %176 = vmatpush.bf16.msra.mxu0 %v161
    %177 = vmatpush.bf16.msra.mxu0 %v160
    %178 = vmatpush.bf16.msra.mxu0 %v159
    %179 = vmatpush.bf16.msra.mxu0 %v158
    %180 = vmatpush.bf16.msra.mxu0 %v157
    %181 = vmatmul.bf16.gmra.mxu0 %v123
    %v182 = vpop.f32.mrf.mxu0
    %v183 = vadd.f32 %v117, %v182
    %v184 = vpop.f32.mrf.mxu0
    %v185 = vadd.f32 %v117, %v184
    %186 = vdwg.mxu0
    %v187 = vsub.f32 0.0, %v183
    %v188 = vsub.f32 0.0, %v185
    %v189 = vmul.f32 %v187, 1.442695
    %v190 = vpow.pop %v189
    %v191 = vmul.f32 %v188, 1.442695
    %v192 = vpow.pop %v191
    %v193 = vadd.f32 %v190, 1.0
    %v194 = vadd.f32 %v192, 1.0
    %v195 = vrcp.pop %v193
    %v196 = vrcp.pop %v194
    %v197 = vld [vmem:[%s5] sm:$0xff]
    %v198 = vld [vmem:[%s5 + $0x8] sm:$0xff]
    %v199 = vld [vmem:[%s5 + $0x10] sm:$0xff]
    %v200 = vld [vmem:[%s5 + $0x18] sm:$0xff]
    %v201 = vld [vmem:[%s5 + $0x20] sm:$0xff]
    %v202 = vld [vmem:[%s5 + $0x28] sm:$0xff]
    %v203 = vld [vmem:[%s5 + $0x30] sm:$0xff]
    %v204 = vld [vmem:[%s5 + $0x38] sm:$0xff]
    %v205 = vld [vmem:[%s5 + $0x40] sm:$0xff]
    %v206 = vld [vmem:[%s5 + $0x48] sm:$0xff]
    %v207 = vld [vmem:[%s5 + $0x50] sm:$0xff]
    %v208 = vld [vmem:[%s5 + $0x58] sm:$0xff]
    %v209 = vld [vmem:[%s5 + $0x60] sm:$0xff]
    %v210 = vld [vmem:[%s5 + $0x68] sm:$0xff]
    %v211 = vld [vmem:[%s5 + $0x70] sm:$0xff]
    %v212 = vld [vmem:[%s5 + $0x78] sm:$0xff]
    %v229 = vunpack.c.l.b16 %v197
    %v230 = vunpack.c.h.b16 %v197
    %v231 = vunpack.c.l.b16 %v198
    %v232 = vunpack.c.h.b16 %v198
    %v233 = vunpack.c.l.b16 %v199
    %v234 = vunpack.c.h.b16 %v199
    %v235 = vunpack.c.l.b16 %v200
    %v236 = vunpack.c.h.b16 %v200
    %v237 = vunpack.c.l.b16 %v201
    %v238 = vunpack.c.h.b16 %v201
    %v239 = vunpack.c.l.b16 %v202
    %v240 = vunpack.c.h.b16 %v202
    %v241 = vunpack.c.l.b16 %v203
    %v242 = vunpack.c.h.b16 %v203
    %v243 = vunpack.c.l.b16 %v204
    %v244 = vunpack.c.h.b16 %v204
    %v245 = vunpack.c.l.b16 %v205
    %v246 = vunpack.c.h.b16 %v205
    %v247 = vunpack.c.l.b16 %v206
    %v248 = vunpack.c.h.b16 %v206
    %v249 = vunpack.c.l.b16 %v207
    %v250 = vunpack.c.h.b16 %v207
    %v251 = vunpack.c.l.b16 %v208
    %v252 = vunpack.c.h.b16 %v208
    %v253 = vunpack.c.l.b16 %v209
    %v254 = vunpack.c.h.b16 %v209
    %v255 = vunpack.c.l.b16 %v210
    %v256 = vunpack.c.h.b16 %v210
    %v257 = vunpack.c.l.b16 %v211
    %v258 = vunpack.c.h.b16 %v211
    %v259 = vunpack.c.l.b16 %v212
    %v260 = vunpack.c.h.b16 %v212
    %v261 = vpack.c.b16 %v231, %v229
    %v262 = vpack.c.b16 %v232, %v230
    %v263 = vpack.c.b16 %v235, %v233
    %v264 = vpack.c.b16 %v236, %v234
    %v265 = vpack.c.b16 %v239, %v237
    %v266 = vpack.c.b16 %v240, %v238
    %v267 = vpack.c.b16 %v243, %v241
    %v268 = vpack.c.b16 %v244, %v242
    %v269 = vpack.c.b16 %v247, %v245
    %v270 = vpack.c.b16 %v248, %v246
    %v271 = vpack.c.b16 %v251, %v249
    %v272 = vpack.c.b16 %v252, %v250
    %v273 = vpack.c.b16 %v255, %v253
    %v274 = vpack.c.b16 %v256, %v254
    %v275 = vpack.c.b16 %v259, %v257
    %v276 = vpack.c.b16 %v260, %v258
    %293 = vmatpush.bf16.msra.mxu0 %v275
    %294 = vmatpush.bf16.msra.mxu0 %v273
    %295 = vmatpush.bf16.msra.mxu0 %v271
    %296 = vmatpush.bf16.msra.mxu0 %v269
    %297 = vmatpush.bf16.msra.mxu0 %v267
    %298 = vmatpush.bf16.msra.mxu0 %v265
    %299 = vmatpush.bf16.msra.mxu0 %v263
    %300 = vmatpush.bf16.msra.mxu0 %v261
    %301 = vmatmul.bf16.gmra.mxu0 %v123
    %v302 = vpop.f32.mrf.mxu0
    %v303 = vadd.f32 0.0, %v302
    %v304 = vpop.f32.mrf.mxu0
    %v305 = vadd.f32 0.0, %v304
    %306 = vdwg.mxu0
    %307 = vmatpush.bf16.msra.mxu0 %v276
    %308 = vmatpush.bf16.msra.mxu0 %v274
    %309 = vmatpush.bf16.msra.mxu0 %v272
    %310 = vmatpush.bf16.msra.mxu0 %v270
    %311 = vmatpush.bf16.msra.mxu0 %v268
    %312 = vmatpush.bf16.msra.mxu0 %v266
    %313 = vmatpush.bf16.msra.mxu0 %v264
    %314 = vmatpush.bf16.msra.mxu0 %v262
    %315 = vmatmul.bf16.gmra.mxu0 %v123
    %v316 = vpop.f32.mrf.mxu0
    %v317 = vadd.f32 0.0, %v316
    %v318 = vpop.f32.mrf.mxu0
    %v319 = vadd.f32 0.0, %v318
    %320 = vdwg.mxu0
    %v321 = vmax.f32 %v303, %v317
    %322 = vmax.xlane.f32.xlu0 %v321
    %v323 = vpop.xlane.xlu0 %322
    %v324 = vmax.f32 %v305, %v319
    %325 = vmax.xlane.f32.xlu0 %v324
    %v326 = vpop.xlane.xlu0 %325
    %v327 = vsub.f32 %v303, %v323
    %v328 = vsub.f32 %v317, %v323
    %v329 = vsub.f32 %v305, %v326
    %v330 = vsub.f32 %v319, %v326
    %v331 = vmul.f32 %v327, 1.442695
    %v332 = vpow.pop %v331
    %v333 = vmul.f32 %v328, 1.442695
    %v334 = vpow.pop %v333
    %v335 = vmul.f32 %v329, 1.442695
    %v336 = vpow.pop %v335
    %v337 = vmul.f32 %v330, 1.442695
    %v338 = vpow.pop %v337
    %v339 = vld [vmem:[%s6] sm:$0xff]
    %v340 = vld [vmem:[%s6 + $0x8] sm:$0xff]
    %v341 = vld [vmem:[%s6 + $0x10] sm:$0xff]
    %v342 = vld [vmem:[%s6 + $0x18] sm:$0xff]
    %v343 = vld [vmem:[%s6 + $0x20] sm:$0xff]
    %v344 = vld [vmem:[%s6 + $0x28] sm:$0xff]
    %v345 = vld [vmem:[%s6 + $0x30] sm:$0xff]
    %v346 = vld [vmem:[%s6 + $0x38] sm:$0xff]
    %v347 = vld [vmem:[%s6 + $0x40] sm:$0xff]
    %v348 = vld [vmem:[%s6 + $0x48] sm:$0xff]
    %v349 = vld [vmem:[%s6 + $0x50] sm:$0xff]
    %v350 = vld [vmem:[%s6 + $0x58] sm:$0xff]
    %v351 = vld [vmem:[%s6 + $0x60] sm:$0xff]
    %v352 = vld [vmem:[%s6 + $0x68] sm:$0xff]
    %v353 = vld [vmem:[%s6 + $0x70] sm:$0xff]
    %v354 = vld [vmem:[%s6 + $0x78] sm:$0xff]
    %v355 = vld [vmem:[%s6 + $0x80] sm:$0xff]
    %v356 = vld [vmem:[%s6 + $0x88] sm:$0xff]
    %v357 = vld [vmem:[%s6 + $0x90] sm:$0xff]
    %v358 = vld [vmem:[%s6 + $0x98] sm:$0xff]
    %v359 = vld [vmem:[%s6 + $0xa0] sm:$0xff]
    %v360 = vld [vmem:[%s6 + $0xa8] sm:$0xff]
    %v361 = vld [vmem:[%s6 + $0xb0] sm:$0xff]
    %v362 = vld [vmem:[%s6 + $0xb8] sm:$0xff]
    %v363 = vld [vmem:[%s6 + $0xc0] sm:$0xff]
    %v364 = vld [vmem:[%s6 + $0xc8] sm:$0xff]
    %v365 = vld [vmem:[%s6 + $0xd0] sm:$0xff]
    %v366 = vld [vmem:[%s6 + $0xd8] sm:$0xff]
    %v367 = vld [vmem:[%s6 + $0xe0] sm:$0xff]
    %v368 = vld [vmem:[%s6 + $0xe8] sm:$0xff]
    %v369 = vld [vmem:[%s6 + $0xf0] sm:$0xff]
    %v370 = vld [vmem:[%s6 + $0xf8] sm:$0xff]
    %371 = vmatpush.msra.mxu0 %v354
    %372 = vmatpush.msra.mxu0 %v353
    %373 = vmatpush.msra.mxu0 %v352
    %374 = vmatpush.msra.mxu0 %v351
    %375 = vmatpush.msra.mxu0 %v350
    %376 = vmatpush.msra.mxu0 %v349
    %377 = vmatpush.msra.mxu0 %v348
    %378 = vmatpush.msra.mxu0 %v347
    %379 = vmatpush.msra.mxu0 %v346
    %380 = vmatpush.msra.mxu0 %v345
    %381 = vmatpush.msra.mxu0 %v344
    %382 = vmatpush.msra.mxu0 %v343
    %383 = vmatpush.msra.mxu0 %v342
    %384 = vmatpush.msra.mxu0 %v341
    %385 = vmatpush.msra.mxu0 %v340
    %386 = vmatpush.msra.mxu0 %v339
    %387 = vmatmul.f32.gmra.mxu0 %v332
    %v388 = vpop.f32.mrf.mxu0
    %v389 = vadd.f32 0.0, %v388
    %390 = vmatmul.f32.gmra.mxu0 %v336
    %v391 = vpop.f32.mrf.mxu0
    %v392 = vadd.f32 0.0, %v391
    %393 = vdwg.mxu0
    %394 = vmatpush.msra.mxu0 %v370
    %395 = vmatpush.msra.mxu0 %v369
    %396 = vmatpush.msra.mxu0 %v368
    %397 = vmatpush.msra.mxu0 %v367
    %398 = vmatpush.msra.mxu0 %v366
    %399 = vmatpush.msra.mxu0 %v365
    %400 = vmatpush.msra.mxu0 %v364
    %401 = vmatpush.msra.mxu0 %v363
    %402 = vmatpush.msra.mxu0 %v362
    %403 = vmatpush.msra.mxu0 %v361
    %404 = vmatpush.msra.mxu0 %v360
    %405 = vmatpush.msra.mxu0 %v359
    %406 = vmatpush.msra.mxu0 %v358
    %407 = vmatpush.msra.mxu0 %v357
    %408 = vmatpush.msra.mxu0 %v356
    %409 = vmatpush.msra.mxu0 %v355
    %410 = vmatmul.f32.gmra.mxu0 %v334
    %v411 = vpop.f32.mrf.mxu0
    %v412 = vadd.f32 %v389, %v411
    %413 = vmatmul.f32.gmra.mxu0 %v338
    %v414 = vpop.f32.mrf.mxu0
    %v415 = vadd.f32 %v392, %v414
    %416 = vdwg.mxu0
    %v417 = vmax.f32 %v412, 1e-30
    %v418 = vmax.f32 %v415, 1e-30
    %v419 = vrcp.pop %v417
    %v420 = vrcp.pop %v418
    %v421 = vmul.f32 %v195, %v419
    %v422 = vmul.f32 %v196, %v420
    %v423 = vld [vmem:[%s7] sm:$0xff]
    %v424 = vld [vmem:[%s7 + $0x8] sm:$0xff]
    %vm425 = vcmask 64512
    %v427 = vsel %vm425, %v421, 0
    %v430 = vsel %vm425, %v422, 0
    %432 = vmatpush.msra.mxu0 0.0
    %433 = vmatpush.msra.mxu0 0.0
    %434 = vmatpush.msra.mxu0 0.0
    %435 = vmatpush.msra.mxu0 0.0
    %436 = vmatpush.msra.mxu0 0.0
    %437 = vmatpush.msra.mxu0 0.0
    %438 = vmatpush.msra.mxu0 0.0
    %439 = vmatpush.msra.mxu0 0.0
    %440 = vmatpush.msra.mxu0 0.0
    %441 = vmatpush.msra.mxu0 0.0
    %442 = vmatpush.msra.mxu0 0.0
    %443 = vmatpush.msra.mxu0 0.0
    %444 = vmatpush.msra.mxu0 0.0
    %445 = vmatpush.msra.mxu0 0.0
    %446 = vmatpush.msra.mxu0 0.0
    %447 = vmatpush.msra.mxu0 %v423
    %448 = vmatmul.f32.gmra.mxu0 %v427
    %v449 = vpop.f32.mrf.mxu0
    %v450 = vadd.f32 0.0, %v449
    %451 = vmatmul.f32.gmra.mxu0 %v430
    %v452 = vpop.f32.mrf.mxu0
    %v453 = vadd.f32 0.0, %v452
    %454 = vdwg.mxu0
    %455 = vmatpush.msra.mxu0 0.0
    %456 = vmatpush.msra.mxu0 0.0
    %457 = vmatpush.msra.mxu0 0.0
    %458 = vmatpush.msra.mxu0 0.0
    %459 = vmatpush.msra.mxu0 0.0
    %460 = vmatpush.msra.mxu0 0.0
    %461 = vmatpush.msra.mxu0 0.0
    %462 = vmatpush.msra.mxu0 0.0
    %463 = vmatpush.msra.mxu0 0.0
    %464 = vmatpush.msra.mxu0 0.0
    %465 = vmatpush.msra.mxu0 0.0
    %466 = vmatpush.msra.mxu0 0.0
    %467 = vmatpush.msra.mxu0 0.0
    %468 = vmatpush.msra.mxu0 0.0
    %469 = vmatpush.msra.mxu0 0.0
    %470 = vmatpush.msra.mxu0 %v424
    %471 = vmatmul.f32.gmra.mxu0 %v427
    %v472 = vpop.f32.mrf.mxu0
    %v473 = vadd.f32 0.0, %v472
    %474 = vmatmul.f32.gmra.mxu0 %v430
    %v475 = vpop.f32.mrf.mxu0
    %v476 = vadd.f32 0.0, %v475
    %477 = vdwg.mxu0
    %v478 = vmul.f32 %v332, %v450
    %v479 = vmul.f32 %v334, %v473
    %v480 = vmul.f32 %v336, %v453
    %v481 = vmul.f32 %v338, %v476
    %v482 = vpack.c.bf16 %v479, %v478
    %v483 = vpack.c.bf16 %v481, %v480
    %484 = vst [vmem:[#allocation4] sm:$0xff] %v482
    %485 = vst [vmem:[#allocation4 + $0x8] sm:$0xff] %v483
    // Predicated region
    $region34: #{tpu_custom_call.1} parent=1 // pred_check
      _
    $region35: #{tpu_custom_call.1} parent=1 // pred_check_branch
      %487 = sbr.rel (0) target = $region37
    $region36: #{tpu_custom_call.1} parent=1 // pred_region
      %489 = vsyncadd [#allocation3], 0
      %s490 = sshll.u32 [#allocation2], 4
      %s491 = int_to_ptr.vmem [resolvable:$true] %s490
      %s492 = sshll.u32 %s8, 4
      %s493 = int_to_ptr.hbm [resolvable:$true] %s492
      %498 = dma.vmem_to_hbm [thread:$0]  %s491, 128, %s493, [#allocation3], 64, 64, 4
    $region37: #{tpu_custom_call.1} parent=1 // pred_fallthru
      _
    // Predicated region
    $region38: #{tpu_custom_call.1} parent=1 // pred_check
      _
    $region39: #{tpu_custom_call.1} parent=1 // pred_check_branch
      %500 = sbr.rel (0) target = $region41
    $region40: #{tpu_custom_call.1} parent=1 // pred_region
      %502 = vsyncadd [#allocation5], 0
      %s503 = sshll.u32 [#allocation4], 4
      %s504 = int_to_ptr.vmem [resolvable:$true] %s503
      %s505 = sshll.u32 %s9, 4
      %s506 = int_to_ptr.hbm [resolvable:$true] %s505
      %511 = dma.vmem_to_hbm [thread:$0]  %s504, 256, %s506, [#allocation5], 128, 128, 8
    $region41: #{tpu_custom_call.1} parent=1 // pred_fallthru
      _
    // Predicated region
    $region42: #{tpu_custom_call.1} parent=1 // pred_check
      _
    $region43: #{tpu_custom_call.1} parent=1 // pred_check_branch
      %513 = sbr.rel (0) target = $region45
    $region44: #{tpu_custom_call.1} parent=1 // pred_region
      %515 = dma.done [#allocation3], 128
    $region45: #{tpu_custom_call.1} parent=1 // pred_fallthru
      _
    // Predicated region
    $region46: #{tpu_custom_call.1} parent=1 // pred_check
      _
    $region47: #{tpu_custom_call.1} parent=1 // pred_check_branch
      %517 = sbr.rel (0) target = $region49
    $region48: #{tpu_custom_call.1} parent=1 // pred_region
      %519 = dma.done [#allocation5], 256
    $region49: #{tpu_custom_call.1} parent=1 // pred_fallthru
      _
    %520 = vsyncpa [#allocation3], 1
    %521 = vsyncpa [#allocation5], 1

</llo_original>
